<compile_context>
chip_gen: v5e
topology: v5e:2x2
jax: 0.10.0
libtpu: 0.0.40
codegen_flags: <defaults>
</compile_context>

<pallas_src>
import functools

import numpy as np

import jax
import jax.numpy as jnp
from jax.experimental import pallas as pl
from jax.experimental.pallas import tpu as pltpu


def _conv_gn_elu_kernel(x_ref, w_ref, mask_ref, p_ref, gmap_ref, gmapT_ref,
                        o_ref, *, H, W, KH, KW, padding, dilation,
                        num_groups, eps):
    # x_ref:     (1, Cin, HW + 2*S)     one sample, flat spatial, halo-padded lanes
    # w_ref:     (Cout, KH*KW*Cin)      conv weight, im2col-ordered columns
    # mask_ref:  (KH*KW, 1, HW)         per-tap validity mask (conv zero-padding)
    # p_ref:     (Cout, 3)              [bias | gamma | beta] columns
    # gmap_ref:  (G, Cout)              one-hot channel->group reduce map
    # gmapT_ref: (Cout, G)              one-hot group->channel broadcast map
    # o_ref:     (1, Cout, HW)          lane-dense (HW multiple of 128) output
    HW = H * W
    S = padding * W + padding                     # max |flattened shift|
    cout = o_ref.shape[1]

    xw = x_ref[0]                                 # (Cin, HW + 2*S)

    # Build the im2col tile in VMEM: per tap, a statically shifted,
    # padding-masked (Cin, HW) slice; stacked along sublanes.
    cols = []
    for i in range(KH):
        for j in range(KW):
            idx = i * KW + j
            di = i * dilation - padding
            dj = j * dilation - padding
            s = di * W + dj                       # flattened spatial shift
            xs = xw[:, S + s: S + s + HW]         # (Cin, HW), static lane slice
            if di != 0 or dj != 0:
                xs = xs * mask_ref[idx]           # zero the out-of-image taps
            cols.append(xs)
    xcol = jnp.concatenate(cols, axis=0)          # (KH*KW*Cin, HW)

    # Whole conv as a single MXU matmul, f32 accumulation.
    y = jnp.dot(w_ref[...], xcol,
                preferred_element_type=jnp.float32)      # (Cout, HW)

    bias = p_ref[:, 0:1]                          # (Cout, 1)
    gamma = p_ref[:, 1:2]
    beta = p_ref[:, 2:3]
    y = y + bias                                  # conv bias (per-channel; not
                                                  # cancelled by the group mean)

    # GroupNorm over (channels-in-group, spatial), two-pass for stability.
    gmap = gmap_ref[...]                          # (G, Cout)
    gmapT = gmapT_ref[...]                        # (Cout, G)
    cpg = cout // num_groups
    inv_count = 1.0 / float(HW * cpg)

    ch_sum = jnp.sum(y, axis=1, keepdims=True)                        # (Cout, 1)
    g_mean = jnp.dot(gmap, ch_sum,
                     preferred_element_type=jnp.float32) * inv_count  # (G, 1)
    mean_c = jnp.dot(gmapT, g_mean,
                     preferred_element_type=jnp.float32)              # (Cout, 1)
    cent = y - mean_c
    ch_sq = jnp.sum(cent * cent, axis=1, keepdims=True)               # (Cout, 1)
    g_var = jnp.dot(gmap, ch_sq,
                    preferred_element_type=jnp.float32) * inv_count   # (G, 1)
    g_inv = jax.lax.rsqrt(g_var + eps)                                # (G, 1)
    inv_c = jnp.dot(gmapT, g_inv,
                    preferred_element_type=jnp.float32)               # (Cout, 1)

    yn = cent * inv_c * gamma + beta

    # ELU (alpha = 1.0): x if x > 0 else exp(x) - 1.
    out = jnp.where(yn > 0, yn, jnp.exp(yn) - 1.0)
    o_ref[0] = out.astype(o_ref.dtype)


def my_conv_forward(x_nchw, weight_oihw, bias, gamma, beta, *,
                    stride=1, padding=0, dilation=1, num_groups=4, eps=1e-5):
    """Conv2d -> GroupNorm -> ELU.  x is NCHW (like PyTorch); returns NCHW."""
    n, cin, h, w = x_nchw.shape
    cout, cin_w, kh, kw = weight_oihw.shape
    assert cin == cin_w
    assert cin == cout                 # PyTorch spec: GroupNorm(num_channels=in_ch)
    assert cout % num_groups == 0
    # Kernel is specialized to "same"-size convs (stride 1, out HW == in HW),
    # which is exactly the myConv(kSize=3, stride=1, padding=1) configuration.
    assert stride == 1
    assert 2 * padding == dilation * (kh - 1) == dilation * (kw - 1)
    # TODO(synk): general stride / non-"same" padding would need an im2col path.

    hw = h * w
    S = padding * w + padding

    # Host prep (cheap XLA): flatten spatial and add a small flat halo of zeros.
    x_flat = x_nchw.reshape(n, cin, hw)
    if S > 0:
        x_flat = jnp.pad(x_flat, ((0, 0), (0, 0), (S, S)))
    lanes = hw + 2 * S

    # Weight: (Cout, Cin, KH, KW) -> (Cout, KH*KW*Cin) in im2col column order
    # (tap-major, channel-fastest) to match the in-kernel xcol stacking.
    w_r = jnp.transpose(weight_oihw, (0, 2, 3, 1)).reshape(cout, kh * kw * cin)
    w_r = w_r.astype(jnp.float32)

    # Packed per-channel params: [bias | gamma | beta].
    params = jnp.stack([bias, gamma, beta], axis=1).astype(jnp.float32)  # (Cout, 3)

    # Compile-time constant tables (built with numpy, passed as inputs).
    cpg = cout // num_groups
    gmap_np = (np.arange(num_groups)[:, None] ==
               (np.arange(cout) // cpg)[None, :]).astype(np.float32)     # (G, Cout)
    gmap = jnp.asarray(gmap_np)
    gmapT = jnp.asarray(gmap_np.T)                                       # (Cout, G)

    oh_np = np.arange(h)[:, None]
    ow_np = np.arange(w)[None, :]
    mask_list = []
    for i in range(kh):
        for j in range(kw):
            di = i * dilation - padding
            dj = j * dilation - padding
            m = ((oh_np + di >= 0) & (oh_np + di < h) &
                 (ow_np + dj >= 0) & (ow_np + dj < w))
            mask_list.append(m.reshape(1, hw))
    masks = jnp.asarray(np.stack(mask_list, axis=0).astype(np.float32))  # (KH*KW, 1, HW)

    kernel = functools.partial(
        _conv_gn_elu_kernel, H=h, W=w, KH=kh, KW=kw, padding=padding,
        dilation=dilation, num_groups=num_groups, eps=float(eps))

    out = pl.pallas_call(
        kernel,
        out_shape=jax.ShapeDtypeStruct((n, cout, hw), x_nchw.dtype),
        grid_spec=pltpu.PrefetchScalarGridSpec(
            num_scalar_prefetch=0,
            grid=(n,),
            in_specs=[
                pl.BlockSpec((1, cin, lanes), lambda b: (b, 0, 0)),
                pl.BlockSpec((cout, kh * kw * cin), lambda b: (0, 0)),
                pl.BlockSpec((kh * kw, 1, hw), lambda b: (0, 0, 0)),
                pl.BlockSpec((cout, 3), lambda b: (0, 0)),
                pl.BlockSpec((num_groups, cout), lambda b: (0, 0)),
                pl.BlockSpec((cout, num_groups), lambda b: (0, 0)),
            ],
            out_specs=pl.BlockSpec((1, cout, hw), lambda b: (b, 0, 0)),
        ),
        compiler_params=pltpu.CompilerParams(
            dimension_semantics=("parallel",),   # one sample per TC on v7x
            vmem_limit_bytes=32 * 1024 * 1024),
    )(x_flat, w_r, masks, params, gmap, gmapT)

    # Output is already channel-major: just reshape to NCHW (no transpose).
    return out.reshape(n, cout, h, w)


def _reference(x_nchw, weight_oihw, bias, gamma, beta,
               *, stride, padding, dilation, num_groups, eps=1e-5):
    """Pure-JAX reference (for correctness check only)."""
    y = jax.lax.conv_general_dilated(
        x_nchw, weight_oihw, window_strides=(stride, stride),
        padding=[(padding, padding), (padding, padding)],
        rhs_dilation=(dilation, dilation),
        dimension_numbers=('NCHW', 'OIHW', 'NCHW'),
        precision=jax.lax.Precision.HIGHEST)
    y = y + bias.reshape(1, -1, 1, 1)
    n, c, h, w = y.shape
    yg = y.reshape(n, num_groups, (c // num_groups) * h * w)
    mean = yg.mean(-1, keepdims=True)
    var = yg.var(-1, keepdims=True)
    yn = ((yg - mean) * jax.lax.rsqrt(var + eps)).reshape(n, c, h, w)
    yn = yn * gamma.reshape(1, -1, 1, 1) + beta.reshape(1, -1, 1, 1)
    return jnp.where(yn > 0, yn, jnp.expm1(yn))


if __name__ == "__main__":
    # Small shapes consistent with myConv(in_ch=8, out_ch=8, kSize=3,
    # stride=1, padding=1, norm='GN', act='ELU', num_groups=4).
    N, C_IN, C_OUT, H, W = 2, 8, 8, 16, 16
    K_SIZE, STRIDE, PAD, DIL, GROUPS = 3, 1, 1, 1, 4

    key = jax.random.PRNGKey(0)
    kx, kw_, kb = jax.random.split(key, 3)
    x = jax.random.normal(kx, (N, C_IN, H, W), dtype=jnp.float32)
    weight = 0.1 * jax.random.normal(kw_, (C_OUT, C_IN, K_SIZE, K_SIZE),
                                     dtype=jnp.float32)
    bias = 0.1 * jax.random.normal(kb, (C_OUT,), dtype=jnp.float32)
    gamma = jnp.ones((C_OUT,), dtype=jnp.float32)   # GroupNorm default affine init
    beta = jnp.zeros((C_OUT,), dtype=jnp.float32)

    out = my_conv_forward(x, weight, bias, gamma, beta,
                          stride=STRIDE, padding=PAD, dilation=DIL,
                          num_groups=GROUPS)
    out = jax.block_until_ready(out)

    ref = _reference(x, weight, bias, gamma, beta,
                     stride=STRIDE, padding=PAD, dilation=DIL,
                     num_groups=GROUPS)
    assert out.shape == (N, C_OUT, H, W)
    err = float(jnp.max(jnp.abs(out - ref)))
    assert err < 2e-4, f"mismatch vs reference: {err}"

    print("KERNEL_OK")
</pallas_src>

<mosaic_0001>
module attributes {stable_mosaic.version = 11 : i64} {
  func.func @_conv_gn_elu_kernel(%arg0: i32, %arg1: memref<1x8x290xf32, #tpu.memory_space<vmem>>, %arg2: memref<8x72xf32, #tpu.memory_space<vmem>>, %arg3: memref<9x1x256xf32, #tpu.memory_space<vmem>>, %arg4: memref<8x3xf32, #tpu.memory_space<vmem>>, %arg5: memref<4x8xf32, #tpu.memory_space<vmem>>, %arg6: memref<8x4xf32, #tpu.memory_space<vmem>>, %arg7: memref<1x8x256xf32, #tpu.memory_space<vmem>>) attributes {dimension_semantics = [#tpu.dimension_semantics<parallel>], iteration_bounds = array<i64: 2>, scalar_prefetch = 0 : i64, scratch_operands = 0 : i64, tpu.core_type = #tpu.core_type<tc>, window_params = [{transform_indices = @transform_0, window_bounds = array<i64: 1, 8, 290>}, {pipeline_mode = #tpu.pipeline_mode<synchronous>, transform_indices = @transform_1, window_bounds = array<i64: 8, 72>}, {pipeline_mode = #tpu.pipeline_mode<synchronous>, transform_indices = @transform_2, window_bounds = array<i64: 9, 1, 256>}, {pipeline_mode = #tpu.pipeline_mode<synchronous>, transform_indices = @transform_3, window_bounds = array<i64: 8, 3>}, {pipeline_mode = #tpu.pipeline_mode<synchronous>, transform_indices = @transform_4, window_bounds = array<i64: 4, 8>}, {pipeline_mode = #tpu.pipeline_mode<synchronous>, transform_indices = @transform_5, window_bounds = array<i64: 8, 4>}, {transform_indices = @transform_6, window_bounds = array<i64: 1, 8, 256>}]} {
    %c0 = arith.constant 0 : index
    %c0_0 = arith.constant 0 : index
    %c0_1 = arith.constant 0 : index
    %0 = vector.load %arg1[%c0, %c0_0, %c0_1] : memref<1x8x290xf32, #tpu.memory_space<vmem>>, vector<1x8x290xf32>
    %1 = vector.shape_cast %0 : vector<1x8x290xf32> to vector<8x290xf32>
    %2 = vector.extract_strided_slice %1 {offsets = [0, 0], sizes = [8, 256], strides = [1, 1]} : vector<8x290xf32> to vector<8x256xf32>
    %c0_2 = arith.constant 0 : index
    %c0_3 = arith.constant 0 : index
    %c0_4 = arith.constant 0 : index
    %3 = vector.load %arg3[%c0_2, %c0_3, %c0_4] : memref<9x1x256xf32, #tpu.memory_space<vmem>>, vector<1x1x256xf32>
    %4 = vector.shape_cast %3 : vector<1x1x256xf32> to vector<1x256xf32>
    %5 = vector.broadcast %4 : vector<1x256xf32> to vector<8x256xf32>
    %6 = arith.mulf %2, %5 : vector<8x256xf32>
    %7 = vector.extract_strided_slice %1 {offsets = [0, 1], sizes = [8, 256], strides = [1, 1]} : vector<8x290xf32> to vector<8x256xf32>
    %c1 = arith.constant 1 : index
    %c0_5 = arith.constant 0 : index
    %c0_6 = arith.constant 0 : index
    %8 = vector.load %arg3[%c1, %c0_5, %c0_6] : memref<9x1x256xf32, #tpu.memory_space<vmem>>, vector<1x1x256xf32>
    %9 = vector.shape_cast %8 : vector<1x1x256xf32> to vector<1x256xf32>
    %10 = vector.broadcast %9 : vector<1x256xf32> to vector<8x256xf32>
    %11 = arith.mulf %7, %10 : vector<8x256xf32>
    %12 = vector.extract_strided_slice %1 {offsets = [0, 2], sizes = [8, 256], strides = [1, 1]} : vector<8x290xf32> to vector<8x256xf32>
    %c2 = arith.constant 2 : index
    %c0_7 = arith.constant 0 : index
    %c0_8 = arith.constant 0 : index
    %13 = vector.load %arg3[%c2, %c0_7, %c0_8] : memref<9x1x256xf32, #tpu.memory_space<vmem>>, vector<1x1x256xf32>
    %14 = vector.shape_cast %13 : vector<1x1x256xf32> to vector<1x256xf32>
    %15 = vector.broadcast %14 : vector<1x256xf32> to vector<8x256xf32>
    %16 = arith.mulf %12, %15 : vector<8x256xf32>
    %17 = vector.extract_strided_slice %1 {offsets = [0, 16], sizes = [8, 256], strides = [1, 1]} : vector<8x290xf32> to vector<8x256xf32>
    %c3 = arith.constant 3 : index
    %c0_9 = arith.constant 0 : index
    %c0_10 = arith.constant 0 : index
    %18 = vector.load %arg3[%c3, %c0_9, %c0_10] : memref<9x1x256xf32, #tpu.memory_space<vmem>>, vector<1x1x256xf32>
    %19 = vector.shape_cast %18 : vector<1x1x256xf32> to vector<1x256xf32>
    %20 = vector.broadcast %19 : vector<1x256xf32> to vector<8x256xf32>
    %21 = arith.mulf %17, %20 : vector<8x256xf32>
    %22 = vector.extract_strided_slice %1 {offsets = [0, 17], sizes = [8, 256], strides = [1, 1]} : vector<8x290xf32> to vector<8x256xf32>
    %23 = vector.extract_strided_slice %1 {offsets = [0, 18], sizes = [8, 256], strides = [1, 1]} : vector<8x290xf32> to vector<8x256xf32>
    %c5 = arith.constant 5 : index
    %c0_11 = arith.constant 0 : index
    %c0_12 = arith.constant 0 : index
    %24 = vector.load %arg3[%c5, %c0_11, %c0_12] : memref<9x1x256xf32, #tpu.memory_space<vmem>>, vector<1x1x256xf32>
    %25 = vector.shape_cast %24 : vector<1x1x256xf32> to vector<1x256xf32>
    %26 = vector.broadcast %25 : vector<1x256xf32> to vector<8x256xf32>
    %27 = arith.mulf %23, %26 : vector<8x256xf32>
    %28 = vector.extract_strided_slice %1 {offsets = [0, 32], sizes = [8, 256], strides = [1, 1]} : vector<8x290xf32> to vector<8x256xf32>
    %c6 = arith.constant 6 : index
    %c0_13 = arith.constant 0 : index
    %c0_14 = arith.constant 0 : index
    %29 = vector.load %arg3[%c6, %c0_13, %c0_14] : memref<9x1x256xf32, #tpu.memory_space<vmem>>, vector<1x1x256xf32>
    %30 = vector.shape_cast %29 : vector<1x1x256xf32> to vector<1x256xf32>
    %31 = vector.broadcast %30 : vector<1x256xf32> to vector<8x256xf32>
    %32 = arith.mulf %28, %31 : vector<8x256xf32>
    %33 = vector.extract_strided_slice %1 {offsets = [0, 33], sizes = [8, 256], strides = [1, 1]} : vector<8x290xf32> to vector<8x256xf32>
    %c7 = arith.constant 7 : index
    %c0_15 = arith.constant 0 : index
    %c0_16 = arith.constant 0 : index
    %34 = vector.load %arg3[%c7, %c0_15, %c0_16] : memref<9x1x256xf32, #tpu.memory_space<vmem>>, vector<1x1x256xf32>
    %35 = vector.shape_cast %34 : vector<1x1x256xf32> to vector<1x256xf32>
    %36 = vector.broadcast %35 : vector<1x256xf32> to vector<8x256xf32>
    %37 = arith.mulf %33, %36 : vector<8x256xf32>
    %38 = vector.extract_strided_slice %1 {offsets = [0, 34], sizes = [8, 256], strides = [1, 1]} : vector<8x290xf32> to vector<8x256xf32>
    %c8 = arith.constant 8 : index
    %c0_17 = arith.constant 0 : index
    %c0_18 = arith.constant 0 : index
    %39 = vector.load %arg3[%c8, %c0_17, %c0_18] : memref<9x1x256xf32, #tpu.memory_space<vmem>>, vector<1x1x256xf32>
    %40 = vector.shape_cast %39 : vector<1x1x256xf32> to vector<1x256xf32>
    %41 = vector.broadcast %40 : vector<1x256xf32> to vector<8x256xf32>
    %42 = arith.mulf %38, %41 : vector<8x256xf32>
    %43 = tpu.concatenate %6, %11, %16, %21, %22, %27, %32, %37, %42 in 0 : vector<8x256xf32>, vector<8x256xf32>, vector<8x256xf32>, vector<8x256xf32>, vector<8x256xf32>, vector<8x256xf32>, vector<8x256xf32>, vector<8x256xf32>, vector<8x256xf32> -> vector<72x256xf32>
    %c0_19 = arith.constant 0 : index
    %c0_20 = arith.constant 0 : index
    %44 = vector.load %arg2[%c0_19, %c0_20] : memref<8x72xf32, #tpu.memory_space<vmem>>, vector<8x72xf32>
    %cst = arith.constant dense<0.000000e+00> : vector<8x256xf32>
    %45 = tpu.matmul %44, %43, %cst {dimension_numbers = #tpu.dot_dimension_numbers<[1], [0], [0], [1], [0, 0, 1, 1], [], []>} : vector<8x72xf32>, vector<72x256xf32>, vector<8x256xf32> -> vector<8x256xf32>
    %c0_21 = arith.constant 0 : index
    %c0_22 = arith.constant 0 : index
    %46 = vector.load %arg4[%c0_21, %c0_22] : memref<8x3xf32, #tpu.memory_space<vmem>>, vector<8x1xf32>
    %c0_23 = arith.constant 0 : index
    %c1_24 = arith.constant 1 : index
    %47 = vector.load %arg4[%c0_23, %c1_24] : memref<8x3xf32, #tpu.memory_space<vmem>>, vector<8x1xf32>
    %c0_25 = arith.constant 0 : index
    %c2_26 = arith.constant 2 : index
    %48 = vector.load %arg4[%c0_25, %c2_26] : memref<8x3xf32, #tpu.memory_space<vmem>>, vector<8x1xf32>
    %49 = vector.broadcast %46 : vector<8x1xf32> to vector<8x256xf32>
    %50 = arith.addf %45, %49 : vector<8x256xf32>
    %c0_27 = arith.constant 0 : index
    %c0_28 = arith.constant 0 : index
    %51 = vector.load %arg5[%c0_27, %c0_28] : memref<4x8xf32, #tpu.memory_space<vmem>>, vector<4x8xf32>
    %c0_29 = arith.constant 0 : index
    %c0_30 = arith.constant 0 : index
    %52 = vector.load %arg6[%c0_29, %c0_30] : memref<8x4xf32, #tpu.memory_space<vmem>>, vector<8x4xf32>
    %cst_31 = arith.constant dense<0.000000e+00> : vector<8xf32>
    %53 = vector.multi_reduction <add>, %50, %cst_31 [1] : vector<8x256xf32> to vector<8xf32>
    %54 = vector.shape_cast %53 : vector<8xf32> to vector<8x1xf32>
    %cst_32 = arith.constant dense<0.000000e+00> : vector<4x1xf32>
    %55 = tpu.matmul %51, %54, %cst_32 {dimension_numbers = #tpu.dot_dimension_numbers<[1], [0], [0], [1], [0, 0, 1, 1], [], []>} : vector<4x8xf32>, vector<8x1xf32>, vector<4x1xf32> -> vector<4x1xf32>
    %cst_33 = arith.constant 0.001953125 : f32
    %56 = vector.broadcast %cst_33 : f32 to vector<4x1xf32>
    %57 = arith.mulf %55, %56 : vector<4x1xf32>
    %cst_34 = arith.constant dense<0.000000e+00> : vector<8x1xf32>
    %58 = tpu.matmul %52, %57, %cst_34 {dimension_numbers = #tpu.dot_dimension_numbers<[1], [0], [0], [1], [0, 0, 1, 1], [], []>} : vector<8x4xf32>, vector<4x1xf32>, vector<8x1xf32> -> vector<8x1xf32>
    %59 = vector.broadcast %58 : vector<8x1xf32> to vector<8x256xf32>
    %60 = arith.subf %50, %59 : vector<8x256xf32>
    %61 = arith.mulf %60, %60 : vector<8x256xf32>
    %cst_35 = arith.constant dense<0.000000e+00> : vector<8xf32>
    %62 = vector.multi_reduction <add>, %61, %cst_35 [1] : vector<8x256xf32> to vector<8xf32>
    %63 = vector.shape_cast %62 : vector<8xf32> to vector<8x1xf32>
    %cst_36 = arith.constant dense<0.000000e+00> : vector<4x1xf32>
    %64 = tpu.matmul %51, %63, %cst_36 {dimension_numbers = #tpu.dot_dimension_numbers<[1], [0], [0], [1], [0, 0, 1, 1], [], []>} : vector<4x8xf32>, vector<8x1xf32>, vector<4x1xf32> -> vector<4x1xf32>
    %cst_37 = arith.constant 0.001953125 : f32
    %65 = vector.broadcast %cst_37 : f32 to vector<4x1xf32>
    %66 = arith.mulf %64, %65 : vector<4x1xf32>
    %cst_38 = arith.constant 9.99999974E-6 : f32
    %67 = vector.broadcast %cst_38 : f32 to vector<4x1xf32>
    %68 = arith.addf %66, %67 : vector<4x1xf32>
    %69 = math.rsqrt %68 : vector<4x1xf32>
    %cst_39 = arith.constant dense<0.000000e+00> : vector<8x1xf32>
    %70 = tpu.matmul %52, %69, %cst_39 {dimension_numbers = #tpu.dot_dimension_numbers<[1], [0], [0], [1], [0, 0, 1, 1], [], []>} : vector<8x4xf32>, vector<4x1xf32>, vector<8x1xf32> -> vector<8x1xf32>
    %71 = vector.broadcast %70 : vector<8x1xf32> to vector<8x256xf32>
    %72 = arith.mulf %60, %71 : vector<8x256xf32>
    %73 = vector.broadcast %47 : vector<8x1xf32> to vector<8x256xf32>
    %74 = arith.mulf %72, %73 : vector<8x256xf32>
    %75 = vector.broadcast %48 : vector<8x1xf32> to vector<8x256xf32>
    %76 = arith.addf %74, %75 : vector<8x256xf32>
    %cst_40 = arith.constant 0.000000e+00 : f32
    %77 = vector.broadcast %cst_40 : f32 to vector<8x256xf32>
    %78 = arith.cmpf ogt, %76, %77 : vector<8x256xf32>
    %79 = math.exp %76 : vector<8x256xf32>
    %cst_41 = arith.constant 1.000000e+00 : f32
    %80 = vector.broadcast %cst_41 : f32 to vector<8x256xf32>
    %81 = arith.subf %79, %80 : vector<8x256xf32>
    %82 = arith.select %78, %76, %81 : vector<8x256xi1>, vector<8x256xf32>
    %c0_42 = arith.constant 0 : index
    %c0_43 = arith.constant 0 : index
    %c0_44 = arith.constant 0 : index
    %83 = vector.load %arg7[%c0_42, %c0_43, %c0_44] : memref<1x8x256xf32, #tpu.memory_space<vmem>>, vector<1x8x256xf32>
    %84 = vector.shape_cast %83 : vector<1x8x256xf32> to vector<8x256xf32>
    %85 = vector.shape_cast %82 : vector<8x256xf32> to vector<1x8x256xf32>
    tpu.vector_store %arg7[%c0_42, %c0_43, %c0_44], %85 {strides = array<i32>} : memref<1x8x256xf32, #tpu.memory_space<vmem>>, vector<1x8x256xf32>,
    return
  }
  func.func @transform_0(%arg0: i32) -> (i32, i32, i32) {
    %c0_i32 = arith.constant 0 : i32
    %c0_i32_0 = arith.constant 0 : i32
    %c0_i32_1 = arith.constant 0 : i32
    return %arg0, %c0_i32, %c0_i32_0 : i32, i32, i32
  }
  func.func @transform_1(%arg0: i32) -> (i32, i32) {
    %c0_i32 = arith.constant 0 : i32
    %c0_i32_0 = arith.constant 0 : i32
    %c0_i32_1 = arith.constant 0 : i32
    return %c0_i32, %c0_i32_0 : i32, i32
  }
  func.func @transform_2(%arg0: i32) -> (i32, i32, i32) {
    %c0_i32 = arith.constant 0 : i32
    %c0_i32_0 = arith.constant 0 : i32
    %c0_i32_1 = arith.constant 0 : i32
    %c0_i32_2 = arith.constant 0 : i32
    return %c0_i32, %c0_i32_0, %c0_i32_1 : i32, i32, i32
  }
  func.func @transform_3(%arg0: i32) -> (i32, i32) {
    %c0_i32 = arith.constant 0 : i32
    %c0_i32_0 = arith.constant 0 : i32
    %c0_i32_1 = arith.constant 0 : i32
    return %c0_i32, %c0_i32_0 : i32, i32
  }
  func.func @transform_4(%arg0: i32) -> (i32, i32) {
    %c0_i32 = arith.constant 0 : i32
    %c0_i32_0 = arith.constant 0 : i32
    %c0_i32_1 = arith.constant 0 : i32
    return %c0_i32, %c0_i32_0 : i32, i32
  }
  func.func @transform_5(%arg0: i32) -> (i32, i32) {
    %c0_i32 = arith.constant 0 : i32
    %c0_i32_0 = arith.constant 0 : i32
    %c0_i32_1 = arith.constant 0 : i32
    return %c0_i32, %c0_i32_0 : i32, i32
  }
  func.func @transform_6(%arg0: i32) -> (i32, i32, i32) {
    %c0_i32 = arith.constant 0 : i32
    %c0_i32_0 = arith.constant 0 : i32
    %c0_i32_1 = arith.constant 0 : i32
    return %arg0, %c0_i32, %c0_i32_0 : i32, i32, i32
  }
}

</mosaic_0001>

<llo_original>
// kernel: tpu_custom_call.1
$region0: #{tpu_custom_call.1}
  #allocation0 [shape = 'u32[]', space=smem, size = 0x4, offset = 0x4, fixed_abs, tag = 'smem constant byte address 0x4 - core index']
  #allocation1 [shape = 'u32[72,128]{1,0:T(1,128)}', space=vmem, size = 0x9000, scoped, tag = 'internal scratch']
  %s0 = inlined_call_operand.hbm [shape: f32[2,8,290], index: 0, kind: input, shape index: {}]
  %s1 = inlined_call_operand.hbm [shape: f32[8,72], index: 1, kind: input, shape index: {}]
  %s2 = inlined_call_operand.vmem [shape: f32[9,1,256], index: 2, kind: input, shape index: {}]
  %s3 = inlined_call_operand.vmem [shape: f32[8,3], index: 3, kind: input, shape index: {}]
  %s4 = inlined_call_operand.vmem [shape: f32[4,8], index: 4, kind: input, shape index: {}]
  %s5 = inlined_call_operand.vmem [shape: f32[8,4], index: 5, kind: input, shape index: {}]
  %s6 = inlined_call_operand.hbm [shape: f32[2,8,256], index: 6, kind: output, shape index: {}]
  %s7 = sld [smem:[#allocation0]]
  $region65: #{tpu_custom_call.1} parent=0
    _
  %s9 = ssub.s32 1, %s7
  %s10 = scalar_select 0, %s9, %s7
  $region1: #{tpu_custom_call.1} parent=0
    #allocation2 [shape = 'u8[24576]{0}', space=vmem, size = 0x6000, scoped, tag = 'input window, operand 0']
    #allocation3 [shape = 's32[2]{0}', space=sflag, size = 0x8, scoped, tag = 'scoped memory for tpu_custom_call.1']
    #allocation4 [shape = 's32[2]{0}', space=sflag, size = 0x8, scoped, tag = 'scoped memory for tpu_custom_call.1']
    #allocation5 [shape = 'u8[4096]{0}', space=vmem, size = 0x1000, scoped, tag = 'input window, operand 1, single buffered']
    #allocation6 [shape = 's32[1]{0}', space=sflag, size = 0x4, scoped, tag = 'scoped memory for tpu_custom_call.1']
    #allocation7 [shape = 'u8[16384]{0}', space=vmem, size = 0x4000, scoped, tag = 'output window, operand 0']
    %11 = vsyncpa [#allocation3], 0
    %s12 = scalar_lea.sflag [#allocation3], 1
    %13 = vsyncpa %s12, 0
    %14 = vsyncpa [#allocation6], 0
    %15 = vsyncpa [#allocation4], 0
    %s16 = scalar_lea.sflag [#allocation4], 1
    %17 = vsyncpa %s16, 0
    loop: start=0, step=1, limit=4
    $region2: #{tpu_custom_call.1} parent=1 // loop_pre_header
      _
    $region3: #{tpu_custom_call.1} parent=1 // loop_header
      %s19 = sphi 0, %s23
      %p20 = scmp.ge.s32.totalorder %s19, 4
      %s29 = sphi 0, %s31
      %s32 = sphi 0, %s29
      %s33 = sphi 0, %s32
      %s49 = sphi 0, %s33
      %s53 = sphi 0, %s53
      %s55 = sphi 0, %s53
      %s56 = sphi 0, %s55
      %s70 = sphi 0, %s56
      %s74 = sphi 0, %s74
      %s76 = sphi 0, %s74
      %s77 = sphi 0, %s76
      %s91 = sphi 0, %s77
      %s95 = sphi 0, %s95
      %s97 = sphi 0, %s95
      %s98 = sphi 0, %s97
      %s112 = sphi 0, %s98
      %s116 = sphi 0, %s116
      %s118 = sphi 0, %s116
      %s119 = sphi 0, %s118
      %s133 = sphi 0, %s119
      %s137 = sphi 0, %s137
      %s139 = sphi 0, %s137
      %s140 = sphi 0, %s139
      %s154 = sphi 0, %s140
      %s160 = sphi 0, %s162
      %s163 = sphi 0, %s160
      %s164 = sphi 0, %s163
      %s180 = sphi 0, %s164
    $region4: #{tpu_custom_call.1} parent=1 // loop_header_branch
      %22 = sbr.rel (%p20) target = $region8
    $region5: #{tpu_custom_call.1} parent=1 // loop_body
      %s24 = ssub.s32 %s19, 1
      %s25 = ssub.s32 %s19, 2
      %s26 = sadd.s32 %s19, 1
      %s27 = ssub.s32 %s19, %s26
      %p28 = scmp.eq.s32.totalorder %s27, 0
      %s30 = sadd.s32 %s29, 1
      %s31 = scalar_select %p28, %s29, %s30
      %p34 = pneg %p28
      %p35 = scmp.eq.s32.totalorder %s19, 1
      %p36 = por %p34, %p35
      %p37 = scmp.ne.s32.totalorder %s29, %s32
      %p38 = scmp.eq.s32.totalorder %s19, 0
      %p39 = por %p37, %p38
      %p40 = scmp.ne.s32.totalorder %s29, %s32
      %p41 = scmp.eq.s32.totalorder %s24, 1
      %p42 = por %p40, %p41
      %p43 = scmp.ne.s32.totalorder %s32, %s33
      %p44 = scmp.eq.s32.totalorder %s24, 0
      %p45 = por %p43, %p44
      %p46 = scmp.ne.s32.totalorder %s32, %s33
      %p47 = scmp.eq.s32.totalorder %s25, 1
      %p48 = por %p46, %p47
      %p50 = scmp.ne.s32.totalorder %s33, %s49
      %p51 = scmp.eq.s32.totalorder %s25, 0
      %p52 = por %p50, %p51
      %s54 = sadd.s32 %s53, 1
      %p57 = scmp.eq.s32.totalorder %s19, 1
      %p58 = scmp.ne.s32.totalorder %s53, %s55
      %p59 = scmp.eq.s32.totalorder %s19, 0
      %p60 = por %p58, %p59
      %p61 = scmp.ne.s32.totalorder %s53, %s55
      %p62 = scmp.eq.s32.totalorder %s24, 1
      %p63 = por %p61, %p62
      %p64 = scmp.ne.s32.totalorder %s55, %s56
      %p65 = scmp.eq.s32.totalorder %s24, 0
      %p66 = por %p64, %p65
      %p67 = scmp.ne.s32.totalorder %s55, %s56
      %p68 = scmp.eq.s32.totalorder %s25, 1
      %p69 = por %p67, %p68
      %p71 = scmp.ne.s32.totalorder %s56, %s70
      %p72 = scmp.eq.s32.totalorder %s25, 0
      %p73 = por %p71, %p72
      %s75 = sadd.s32 %s74, 1
      %p78 = scmp.eq.s32.totalorder %s19, 1
      %p79 = scmp.ne.s32.totalorder %s74, %s76
      %p80 = scmp.eq.s32.totalorder %s19, 0
      %p81 = por %p79, %p80
      %p82 = scmp.ne.s32.totalorder %s74, %s76
      %p83 = scmp.eq.s32.totalorder %s24, 1
      %p84 = por %p82, %p83
      %p85 = scmp.ne.s32.totalorder %s76, %s77
      %p86 = scmp.eq.s32.totalorder %s24, 0
      %p87 = por %p85, %p86
      %p88 = scmp.ne.s32.totalorder %s76, %s77
      %p89 = scmp.eq.s32.totalorder %s25, 1
      %p90 = por %p88, %p89
      %p92 = scmp.ne.s32.totalorder %s77, %s91
      %p93 = scmp.eq.s32.totalorder %s25, 0
      %p94 = por %p92, %p93
      %s96 = sadd.s32 %s95, 1
      %p99 = scmp.eq.s32.totalorder %s19, 1
      %p100 = scmp.ne.s32.totalorder %s95, %s97
      %p101 = scmp.eq.s32.totalorder %s19, 0
      %p102 = por %p100, %p101
      %p103 = scmp.ne.s32.totalorder %s95, %s97
      %p104 = scmp.eq.s32.totalorder %s24, 1
      %p105 = por %p103, %p104
      %p106 = scmp.ne.s32.totalorder %s97, %s98
      %p107 = scmp.eq.s32.totalorder %s24, 0
      %p108 = por %p106, %p107
      %p109 = scmp.ne.s32.totalorder %s97, %s98
      %p110 = scmp.eq.s32.totalorder %s25, 1
      %p111 = por %p109, %p110
      %p113 = scmp.ne.s32.totalorder %s98, %s112
      %p114 = scmp.eq.s32.totalorder %s25, 0
      %p115 = por %p113, %p114
      %s117 = sadd.s32 %s116, 1
      %p120 = scmp.eq.s32.totalorder %s19, 1
      %p121 = scmp.ne.s32.totalorder %s116, %s118
      %p122 = scmp.eq.s32.totalorder %s19, 0
      %p123 = por %p121, %p122
      %p124 = scmp.ne.s32.totalorder %s116, %s118
      %p125 = scmp.eq.s32.totalorder %s24, 1
      %p126 = por %p124, %p125
      %p127 = scmp.ne.s32.totalorder %s118, %s119
      %p128 = scmp.eq.s32.totalorder %s24, 0
      %p129 = por %p127, %p128
      %p130 = scmp.ne.s32.totalorder %s118, %s119
      %p131 = scmp.eq.s32.totalorder %s25, 1
      %p132 = por %p130, %p131
      %p134 = scmp.ne.s32.totalorder %s119, %s133
      %p135 = scmp.eq.s32.totalorder %s25, 0
      %p136 = por %p134, %p135
      %s138 = sadd.s32 %s137, 1
      %p141 = scmp.eq.s32.totalorder %s19, 1
      %p142 = scmp.ne.s32.totalorder %s137, %s139
      %p143 = scmp.eq.s32.totalorder %s19, 0
      %p144 = por %p142, %p143
      %p145 = scmp.ne.s32.totalorder %s137, %s139
      %p146 = scmp.eq.s32.totalorder %s24, 1
      %p147 = por %p145, %p146
      %p148 = scmp.ne.s32.totalorder %s139, %s140
      %p149 = scmp.eq.s32.totalorder %s24, 0
      %p150 = por %p148, %p149
      %p151 = scmp.ne.s32.totalorder %s139, %s140
      %p152 = scmp.eq.s32.totalorder %s25, 1
      %p153 = por %p151, %p152
      %p155 = scmp.ne.s32.totalorder %s140, %s154
      %p156 = scmp.eq.s32.totalorder %s25, 0
      %p157 = por %p155, %p156
      %s158 = ssub.s32 %s19, %s26
      %p159 = scmp.eq.s32.totalorder %s158, 0
      %s161 = sadd.s32 %s160, 1
      %s162 = scalar_select %p159, %s160, %s161
      %p165 = pneg %p159
      %p166 = scmp.eq.s32.totalorder %s19, 1
      %p167 = por %p165, %p166
      %p168 = scmp.ne.s32.totalorder %s160, %s163
      %p169 = scmp.eq.s32.totalorder %s19, 0
      %p170 = por %p168, %p169
      %p171 = scmp.ne.s32.totalorder %s160, %s163
      %p172 = scmp.eq.s32.totalorder %s24, 1
      %p173 = por %p171, %p172
      %p174 = scmp.ne.s32.totalorder %s163, %s164
      %p175 = scmp.eq.s32.totalorder %s24, 0
      %p176 = por %p174, %p175
      %p177 = scmp.ne.s32.totalorder %s163, %s164
      %p178 = scmp.eq.s32.totalorder %s25, 1
      %p179 = por %p177, %p178
      %p181 = scmp.ne.s32.totalorder %s164, %s180
      %p182 = scmp.eq.s32.totalorder %s25, 0
      %p183 = por %p181, %p182
      %p184 = scmp.le.s32.totalorder 1, %s19
      %p185 = scmp.lt.s32.totalorder %s19, 3
      %p186 = pnand %p184, %p185
      %p187 = pneg %p186
      // Predicated region
      $region9: #{tpu_custom_call.1} parent=5 // pred_check
        _
      $region10: #{tpu_custom_call.1} parent=5 // pred_check_branch
        %189 = sbr.rel (%p186) target = $region12
      $region11: #{tpu_custom_call.1} parent=5 // pred_region
        %s190 = ssub.s32 %s19, 1
        // Predicated region
        $region13: #{tpu_custom_call.1} parent=11 // pred_check
          %p191 = pneg %p66
        $region14: #{tpu_custom_call.1} parent=11 // pred_check_branch
          %193 = sbr.rel (%p191) target = $region16
        $region15: #{tpu_custom_call.1} parent=11 // pred_region
          %195 = vsyncadd [#allocation6], 0
          %s197 = sshll.u32 %s1, 4
          %s198 = int_to_ptr.hbm [resolvable:$true] %s197
          %s199 = sshll.u32 [#allocation5], 4
          %s200 = int_to_ptr.vmem [resolvable:$true] %s199
          %202 = dma.hbm_to_vmem [thread:$0]  %s198, 128, %s200, [#allocation6]
        $region16: #{tpu_custom_call.1} parent=11 // pred_fallthru
          _
        // Predicated region
        $region17: #{tpu_custom_call.1} parent=11 // pred_check
          %p203 = pneg %p87
        $region18: #{tpu_custom_call.1} parent=11 // pred_check_branch
          %205 = sbr.rel (%p203) target = $region20
        $region19: #{tpu_custom_call.1} parent=11 // pred_region
          _
        $region20: #{tpu_custom_call.1} parent=11 // pred_fallthru
          _
        // Predicated region
        $region21: #{tpu_custom_call.1} parent=11 // pred_check
          %p206 = pneg %p108
        $region22: #{tpu_custom_call.1} parent=11 // pred_check_branch
          %208 = sbr.rel (%p206) target = $region24
        $region23: #{tpu_custom_call.1} parent=11 // pred_region
          _
        $region24: #{tpu_custom_call.1} parent=11 // pred_fallthru
          _
        // Predicated region
        $region25: #{tpu_custom_call.1} parent=11 // pred_check
          %p209 = pneg %p129
        $region26: #{tpu_custom_call.1} parent=11 // pred_check_branch
          %211 = sbr.rel (%p209) target = $region28
        $region27: #{tpu_custom_call.1} parent=11 // pred_region
          _
        $region28: #{tpu_custom_call.1} parent=11 // pred_fallthru
          _
        // Predicated region
        $region29: #{tpu_custom_call.1} parent=11 // pred_check
          %p212 = pneg %p150
        $region30: #{tpu_custom_call.1} parent=11 // pred_check_branch
          %214 = sbr.rel (%p212) target = $region32
        $region31: #{tpu_custom_call.1} parent=11 // pred_region
          _
        $region32: #{tpu_custom_call.1} parent=11 // pred_fallthru
          _
      $region12: #{tpu_custom_call.1} parent=5 // pred_fallthru
        _
      %p215 = scmp.lt.s32.totalorder %s19, 2
      // Predicated region
      $region33: #{tpu_custom_call.1} parent=5 // pred_check
        %p216 = pneg %p215
      $region34: #{tpu_custom_call.1} parent=5 // pred_check_branch
        %218 = sbr.rel (%p216) target = $region36
      $region35: #{tpu_custom_call.1} parent=5 // pred_region
        // Predicated region
        $region37: #{tpu_custom_call.1} parent=35 // pred_check
          %p219 = pneg %p39
        $region38: #{tpu_custom_call.1} parent=35 // pred_check_branch
          %221 = sbr.rel (%p219) target = $region40
        $region39: #{tpu_custom_call.1} parent=35 // pred_region
          %s222 = sand.u32 %s29, 1
          %s223 = scalar_lea.sflag [#allocation3], %s222
          %s224 = sand.u32 %s29, 1
          %s225 = smul.addr %s224, 24
          %s226 = scalar_lea.vmem [#allocation2], %s225
          %228 = vsyncadd %s223, 0
          %s229 = smul.addr %s19, 3
          %s230 = smul.addr %s229, 8
          %s231 = scalar_lea.hbm %s0, %s230
          %s233 = sshll.u32 %s231, 4
          %s234 = int_to_ptr.hbm [resolvable:$true] %s233
          %s235 = sshll.u32 %s226, 4
          %s236 = int_to_ptr.vmem [resolvable:$true] %s235
          %238 = dma.hbm_to_vmem [thread:$0]  %s234, 384, %s236, %s223
        $region40: #{tpu_custom_call.1} parent=35 // pred_fallthru
          _
      $region36: #{tpu_custom_call.1} parent=5 // pred_fallthru
        _
      %p239 = scmp.le.s32.totalorder 1, %s19
      %p240 = scmp.lt.s32.totalorder %s19, 3
      %p241 = pnand %p239, %p240
      %p242 = pneg %p241
      // Predicated region
      $region41: #{tpu_custom_call.1} parent=5 // pred_check
        _
      $region42: #{tpu_custom_call.1} parent=5 // pred_check_branch
        %244 = sbr.rel (%p241) target = $region44
      $region43: #{tpu_custom_call.1} parent=5 // pred_region
        %s245 = ssub.s32 %s19, 1
        %s246 = sand.u32 %s32, 1
        %s247 = scalar_lea.sflag [#allocation3], %s246
        %s248 = sand.u32 %s32, 1
        %s249 = smul.addr %s248, 24
        %s250 = scalar_lea.vmem [#allocation2], %s249
        // Predicated region
        $region45: #{tpu_custom_call.1} parent=43 // pred_check
          %p251 = pneg %p45
        $region46: #{tpu_custom_call.1} parent=43 // pred_check_branch
          %253 = sbr.rel (%p251) target = $region48
        $region47: #{tpu_custom_call.1} parent=43 // pred_region
          %255 = dma.done %s247, 384
        $region48: #{tpu_custom_call.1} parent=43 // pred_fallthru
          _
        // Predicated region
        $region49: #{tpu_custom_call.1} parent=43 // pred_check
          %p256 = pneg %p66
        $region50: #{tpu_custom_call.1} parent=43 // pred_check_branch
          %258 = sbr.rel (%p256) target = $region52
        $region51: #{tpu_custom_call.1} parent=43 // pred_region
          %260 = dma.done [#allocation6], 128
        $region52: #{tpu_custom_call.1} parent=43 // pred_fallthru
          _
        %s261 = sand.u32 %s32, 1
        %s262 = scalar_lea.sflag [#allocation3], %s261
        %s263 = sand.u32 %s32, 1
        %s264 = smul.addr %s263, 24
        %s265 = scalar_lea.vmem [#allocation2], %s264
        %p266 = pneg %p45
        %p267 = pneg %p42
        %p268 = pneg %p66
        %p269 = pneg %p63
        %p270 = pneg %p87
        %p271 = pneg %p84
        %p272 = pneg %p108
        %p273 = pneg %p105
        %p274 = pneg %p129
        %p275 = pneg %p126
        %p276 = pneg %p150
        %p277 = pneg %p147
        %p278 = pneg %p176
        %p279 = pneg %p173
        %s280 = sand.u32 %s163, 1
        %s281 = scalar_lea.sflag [#allocation4], %s280
        %s282 = sand.u32 %s163, 1
        %s283 = smul.addr %s282, 16
        %s284 = scalar_lea.vmem [#allocation7], %s283
        %v285 = vld [vmem:[%s250] sm:$0xff]
        %v286 = vld [vmem:[%s250 + $0x8] sm:$0xff]
        %v287 = vld [vmem:[%s250 + $0x10] sm:$0xff]
        %v288 = vld [vmem:[%s2] sm:$0x3]
        %v290 = vperm.slane %v288, 0
        %v291 = vperm.slane %v288, 1
        %v294 = vmul.f32 %v285, %v290
        %v295 = vmul.f32 %v286, %v291
        %s296 = scalar_lea.vmem %s2, 2
        %v297 = vld [vmem:[%s296] sm:$0x3]
        %v299 = vperm.slane %v297, 0
        %v300 = vperm.slane %v297, 1
        %301 = vrot.lane.b32.xlu0 %v299, 1
        %v302 = vpop.permute.xlu0 %301
        %303 = vrot.lane.b32.xlu0 %v300, 1
        %v304 = vpop.permute.xlu0 %303
        %vm305 = vcmask 7168
        %v306 = vsel %vm305, %v302, %v304
        %v310 = vmul.f32 %v285, %v302
        %v311 = vmul.f32 %v286, %v306
        %v312 = vmul.f32 %v287, %v304
        %s313 = scalar_lea.vmem %s2, 4
        %v314 = vld [vmem:[%s313] sm:$0x3]
        %v316 = vperm.slane %v314, 0
        %v317 = vperm.slane %v314, 1
        %318 = vrot.lane.b32.xlu0 %v316, 2
        %v319 = vpop.permute.xlu0 %318
        %320 = vrot.lane.b32.xlu0 %v317, 2
        %v321 = vpop.permute.xlu0 %320
        %vm322 = vcmask 15360
        %v323 = vsel %vm322, %v319, %v321
        %v327 = vmul.f32 %v285, %v319
        %v328 = vmul.f32 %v286, %v323
        %v329 = vmul.f32 %v287, %v321
        %s330 = scalar_lea.vmem %s2, 6
        %v331 = vld [vmem:[%s330] sm:$0x3]
        %v333 = vperm.slane %v331, 0
        %v334 = vperm.slane %v331, 1
        %335 = vrot.lane.b32.xlu0 %v333, 16
        %v336 = vpop.permute.xlu0 %335
        %337 = vrot.lane.b32.xlu0 %v334, 16
        %v338 = vpop.permute.xlu0 %337
        %vm339 = vcmask 130048
        %v340 = vsel %vm339, %v336, %v338
        %v344 = vmul.f32 %v285, %v336
        %v345 = vmul.f32 %v286, %v340
        %v346 = vmul.f32 %v287, %v338
        %s347 = scalar_lea.vmem %s2, 10
        %v348 = vld [vmem:[%s347] sm:$0x3]
        %v350 = vperm.slane %v348, 0
        %v351 = vperm.slane %v348, 1
        %352 = vrot.lane.b32.xlu0 %v350, 18
        %v353 = vpop.permute.xlu0 %352
        %354 = vrot.lane.b32.xlu0 %v351, 18
        %v355 = vpop.permute.xlu0 %354
        %vm356 = vcmask 146432
        %v357 = vsel %vm356, %v353, %v355
        %v361 = vmul.f32 %v285, %v353
        %v362 = vmul.f32 %v286, %v357
        %v363 = vmul.f32 %v287, %v355
        %s364 = scalar_lea.vmem %s2, 12
        %v365 = vld [vmem:[%s364] sm:$0x3]
        %v367 = vperm.slane %v365, 0
        %v368 = vperm.slane %v365, 1
        %369 = vrot.lane.b32.xlu0 %v367, 32
        %v370 = vpop.permute.xlu0 %369
        %371 = vrot.lane.b32.xlu0 %v368, 32
        %v372 = vpop.permute.xlu0 %371
        %vm373 = vcmask 261120
        %v374 = vsel %vm373, %v370, %v372
        %v378 = vmul.f32 %v285, %v370
        %v379 = vmul.f32 %v286, %v374
        %v380 = vmul.f32 %v287, %v372
        %s381 = scalar_lea.vmem %s2, 14
        %v382 = vld [vmem:[%s381] sm:$0x3]
        %v384 = vperm.slane %v382, 0
        %v385 = vperm.slane %v382, 1
        %386 = vrot.lane.b32.xlu0 %v384, 33
        %v387 = vpop.permute.xlu0 %386
        %388 = vrot.lane.b32.xlu0 %v385, 33
        %v389 = vpop.permute.xlu0 %388
        %vm390 = vcmask 269312
        %v391 = vsel %vm390, %v387, %v389
        %v395 = vmul.f32 %v285, %v387
        %v396 = vmul.f32 %v286, %v391
        %v397 = vmul.f32 %v287, %v389
        %s398 = scalar_lea.vmem %s2, 16
        %v399 = vld [vmem:[%s398] sm:$0x3]
        %v401 = vperm.slane %v399, 0
        %v402 = vperm.slane %v399, 1
        %403 = vrot.lane.b32.xlu0 %v401, 34
        %v404 = vpop.permute.xlu0 %403
        %405 = vrot.lane.b32.xlu0 %v402, 34
        %v406 = vpop.permute.xlu0 %405
        %vm407 = vcmask 277504
        %v408 = vsel %vm407, %v404, %v406
        %v412 = vmul.f32 %v285, %v404
        %v413 = vmul.f32 %v286, %v408
        %v414 = vmul.f32 %v287, %v406
        %418 = vrot.lane.b32.xlu0 %v310, 127
        %v419 = vpop.permute.xlu0 %418
        %420 = vrot.lane.b32.xlu0 %v311, 127
        %v421 = vpop.permute.xlu0 %420
        %422 = vrot.lane.b32.xlu0 %v312, 127
        %v423 = vpop.permute.xlu0 %422
        %vm424 = vcmask 1039360
        %v425 = vsel %vm424, %v419, %v421
        %v426 = vsel %vm424, %v421, %v423
        %432 = vrot.lane.b32.xlu0 %v327, 126
        %v433 = vpop.permute.xlu0 %432
        %434 = vrot.lane.b32.xlu0 %v328, 126
        %v435 = vpop.permute.xlu0 %434
        %436 = vrot.lane.b32.xlu0 %v329, 126
        %v437 = vpop.permute.xlu0 %436
        %vm438 = vcmask 1031168
        %v439 = vsel %vm438, %v433, %v435
        %v440 = vsel %vm438, %v435, %v437
        %446 = vrot.lane.b32.xlu0 %v344, 112
        %v447 = vpop.permute.xlu0 %446
        %448 = vrot.lane.b32.xlu0 %v345, 112
        %v449 = vpop.permute.xlu0 %448
        %450 = vrot.lane.b32.xlu0 %v346, 112
        %v451 = vpop.permute.xlu0 %450
        %vm452 = vcmask 916480
        %v453 = vsel %vm452, %v447, %v449
        %v454 = vsel %vm452, %v449, %v451
        %460 = vrot.lane.b32.xlu0 %v285, 111
        %v461 = vpop.permute.xlu0 %460
        %462 = vrot.lane.b32.xlu0 %v286, 111
        %v463 = vpop.permute.xlu0 %462
        %464 = vrot.lane.b32.xlu0 %v287, 111
        %v465 = vpop.permute.xlu0 %464
        %vm466 = vcmask 908288
        %v467 = vsel %vm466, %v461, %v463
        %v468 = vsel %vm466, %v463, %v465
        %474 = vrot.lane.b32.xlu0 %v361, 110
        %v475 = vpop.permute.xlu0 %474
        %476 = vrot.lane.b32.xlu0 %v362, 110
        %v477 = vpop.permute.xlu0 %476
        %478 = vrot.lane.b32.xlu0 %v363, 110
        %v479 = vpop.permute.xlu0 %478
        %vm480 = vcmask 900096
        %v481 = vsel %vm480, %v475, %v477
        %v482 = vsel %vm480, %v477, %v479
        %488 = vrot.lane.b32.xlu0 %v378, 96
        %v489 = vpop.permute.xlu0 %488
        %490 = vrot.lane.b32.xlu0 %v379, 96
        %v491 = vpop.permute.xlu0 %490
        %492 = vrot.lane.b32.xlu0 %v380, 96
        %v493 = vpop.permute.xlu0 %492
        %vm494 = vcmask 785408
        %v495 = vsel %vm494, %v489, %v491
        %v496 = vsel %vm494, %v491, %v493
        %502 = vrot.lane.b32.xlu0 %v395, 95
        %v503 = vpop.permute.xlu0 %502
        %504 = vrot.lane.b32.xlu0 %v396, 95
        %v505 = vpop.permute.xlu0 %504
        %506 = vrot.lane.b32.xlu0 %v397, 95
        %v507 = vpop.permute.xlu0 %506
        %vm508 = vcmask 777216
        %v509 = vsel %vm508, %v503, %v505
        %v510 = vsel %vm508, %v505, %v507
        %516 = vrot.lane.b32.xlu0 %v412, 94
        %v517 = vpop.permute.xlu0 %516
        %518 = vrot.lane.b32.xlu0 %v413, 94
        %v519 = vpop.permute.xlu0 %518
        %520 = vrot.lane.b32.xlu0 %v414, 94
        %v521 = vpop.permute.xlu0 %520
        %vm522 = vcmask 769024
        %v523 = vsel %vm522, %v517, %v519
        %v524 = vsel %vm522, %v519, %v521
        %v527 = vld [vmem:[#allocation5] sm:$0xff]
        %v528 = vld [vmem:[%s3] sm:$0xff]
        %530 = vset.pattern.permute.xlu0 0
        %531 = vperm.xlu0 %530, %v528
        %v532 = vpop.permute.xlu0 %531
        %vm534 = vcmask 588800
        %v536 = vsel %vm534, %v527, 0
        %538 = vmatpush.msra.mxu0 0.0
        %539 = vmatpush.msra.mxu0 0.0
        %540 = vmatpush.msra.mxu0 0.0
        %541 = vmatpush.msra.mxu0 0.0
        %542 = vmatpush.msra.mxu0 0.0
        %543 = vmatpush.msra.mxu0 0.0
        %544 = vmatpush.msra.mxu0 0.0
        %545 = vmatpush.msra.mxu0 %v523
        %546 = vmatpush.msra.mxu0 %v509
        %547 = vmatpush.msra.mxu0 %v495
        %548 = vmatpush.msra.mxu0 %v481
        %549 = vmatpush.msra.mxu0 %v467
        %550 = vmatpush.msra.mxu0 %v453
        %551 = vmatpush.msra.mxu0 %v439
        %552 = vmatpush.msra.mxu0 %v425
        %553 = vmatpush.msra.mxu0 %v294
        %554 = vmatmul.f32.gmra.mxu0 %v536
        %v555 = vpop.f32.mrf.mxu0
        %v556 = vadd.f32 %v532, %v555
        %557 = vdwg.mxu0
        %558 = vmatpush.msra.mxu0 0.0
        %559 = vmatpush.msra.mxu0 0.0
        %560 = vmatpush.msra.mxu0 0.0
        %561 = vmatpush.msra.mxu0 0.0
        %562 = vmatpush.msra.mxu0 0.0
        %563 = vmatpush.msra.mxu0 0.0
        %564 = vmatpush.msra.mxu0 0.0
        %565 = vmatpush.msra.mxu0 %v524
        %566 = vmatpush.msra.mxu0 %v510
        %567 = vmatpush.msra.mxu0 %v496
        %568 = vmatpush.msra.mxu0 %v482
        %569 = vmatpush.msra.mxu0 %v468
        %570 = vmatpush.msra.mxu0 %v454
        %571 = vmatpush.msra.mxu0 %v440
        %572 = vmatpush.msra.mxu0 %v426
        %573 = vmatpush.msra.mxu0 %v295
        %574 = vmatmul.f32.gmra.mxu0 %v536
        %v575 = vpop.f32.mrf.mxu0
        %v576 = vadd.f32 %v532, %v575
        %577 = vdwg.mxu0
        %v578 = vld [vmem:[%s4] sm:$0xf]
        %v579 = vld [vmem:[%s5] sm:$0xff]
        %v580 = vadd.f32 %v556, %v576
        %581 = vadd.xlane.f32.xlu0 %v580
        %v582 = vpop.xlane.xlu0 %581
        %vm583 = vcmask 64512
        %v585 = vsel %vm583, %v578, 0
        %587 = vmatpush.msra.mxu0 0.0
        %588 = vmatpush.msra.mxu0 0.0
        %589 = vmatpush.msra.mxu0 0.0
        %590 = vmatpush.msra.mxu0 0.0
        %591 = vmatpush.msra.mxu0 0.0
        %592 = vmatpush.msra.mxu0 0.0
        %593 = vmatpush.msra.mxu0 0.0
        %594 = vmatpush.msra.mxu0 0.0
        %595 = vmatpush.msra.mxu0 0.0
        %596 = vmatpush.msra.mxu0 0.0
        %597 = vmatpush.msra.mxu0 0.0
        %598 = vmatpush.msra.mxu0 0.0
        %599 = vmatpush.msra.mxu0 0.0
        %600 = vmatpush.msra.mxu0 0.0
        %601 = vmatpush.msra.mxu0 0.0
        %602 = vmatpush.msra.mxu0 %v582
        %603 = vmatmul.f32.gmra.mxu0 %v585
        %v604 = vpop.f32.mrf.mxu0
        %v605 = vadd.f32 0.0, %v604
        %606 = vdwg.mxu0
        %v607 = vmul.f32 %v605, 0.001953125
        %vm608 = vcmask 31744
        %v610 = vsel %vm608, %v579, 0
        %vm612 = vcmask 1043456
        %v614 = vsel %vm612, %v607, 0
        %616 = vmatpush.msra.mxu0 0.0
        %617 = vmatpush.msra.mxu0 0.0
        %618 = vmatpush.msra.mxu0 0.0
        %619 = vmatpush.msra.mxu0 0.0
        %620 = vmatpush.msra.mxu0 0.0
        %621 = vmatpush.msra.mxu0 0.0
        %622 = vmatpush.msra.mxu0 0.0
        %623 = vmatpush.msra.mxu0 0.0
        %624 = vmatpush.msra.mxu0 0.0
        %625 = vmatpush.msra.mxu0 0.0
        %626 = vmatpush.msra.mxu0 0.0
        %627 = vmatpush.msra.mxu0 0.0
        %628 = vmatpush.msra.mxu0 0.0
        %629 = vmatpush.msra.mxu0 0.0
        %630 = vmatpush.msra.mxu0 0.0
        %631 = vmatpush.msra.mxu0 %v614
        %632 = vmatmul.f32.gmra.mxu0 %v610
        %v633 = vpop.f32.mrf.mxu0
        %v634 = vadd.f32 0.0, %v633
        %635 = vdwg.mxu0
        %637 = vset.pattern.permute.xlu0 0
        %638 = vperm.xlu0 %637, %v634
        %v639 = vpop.permute.xlu0 %638
        %v641 = vsub.f32 %v556, %v639
        %v642 = vsub.f32 %v576, %v639
        %v643 = vmul.f32 %v641, %v641
        %v644 = vmul.f32 %v642, %v642
        %v645 = vadd.f32 %v643, %v644
        %646 = vadd.xlane.f32.xlu0 %v645
        %v647 = vpop.xlane.xlu0 %646
        %648 = vmatpush.msra.mxu0 0.0
        %649 = vmatpush.msra.mxu0 0.0
        %650 = vmatpush.msra.mxu0 0.0
        %651 = vmatpush.msra.mxu0 0.0
        %652 = vmatpush.msra.mxu0 0.0
        %653 = vmatpush.msra.mxu0 0.0
        %654 = vmatpush.msra.mxu0 0.0
        %655 = vmatpush.msra.mxu0 0.0
        %656 = vmatpush.msra.mxu0 0.0
        %657 = vmatpush.msra.mxu0 0.0
        %658 = vmatpush.msra.mxu0 0.0
        %659 = vmatpush.msra.mxu0 0.0
        %660 = vmatpush.msra.mxu0 0.0
        %661 = vmatpush.msra.mxu0 0.0
        %662 = vmatpush.msra.mxu0 0.0
        %663 = vmatpush.msra.mxu0 %v647
        %664 = vmatmul.f32.gmra.mxu0 %v585
        %v665 = vpop.f32.mrf.mxu0
        %v666 = vadd.f32 0.0, %v665
        %667 = vdwg.mxu0
        %v668 = vmul.f32 %v666, 0.001953125
        %v669 = vadd.f32 %v668, 1e-05
        %v670 = vrsqrt.pop %v669
        %v671 = vmul.f32 %v670, %v669
        %v672 = vmul.f32 %v671, %v670
        %v673 = vmul.f32 0.5, %v672
        %v674 = vsub.f32 1.5, %v673
        %v675 = vmul.f32 %v670, %v674
        %vm676 = vweird.f32 %v669
        %vm677 = vweird.f32 %v670
        %vm678 = vmor %vm676, %vm677
        %v679 = vsel %vm678, %v670, %v675
        %v681 = vsel %vm612, %v679, 0
        %683 = vmatpush.msra.mxu0 0.0
        %684 = vmatpush.msra.mxu0 0.0
        %685 = vmatpush.msra.mxu0 0.0
        %686 = vmatpush.msra.mxu0 0.0
        %687 = vmatpush.msra.mxu0 0.0
        %688 = vmatpush.msra.mxu0 0.0
        %689 = vmatpush.msra.mxu0 0.0
        %690 = vmatpush.msra.mxu0 0.0
        %691 = vmatpush.msra.mxu0 0.0
        %692 = vmatpush.msra.mxu0 0.0
        %693 = vmatpush.msra.mxu0 0.0
        %694 = vmatpush.msra.mxu0 0.0
        %695 = vmatpush.msra.mxu0 0.0
        %696 = vmatpush.msra.mxu0 0.0
        %697 = vmatpush.msra.mxu0 0.0
        %698 = vmatpush.msra.mxu0 %v681
        %699 = vmatmul.f32.gmra.mxu0 %v610
        %v700 = vpop.f32.mrf.mxu0
        %v701 = vadd.f32 0.0, %v700
        %702 = vdwg.mxu0
        %704 = vset.pattern.permute.xlu0 0
        %705 = vperm.xlu0 %704, %v701
        %v706 = vpop.permute.xlu0 %705
        %v708 = vmul.f32 %v641, %v706
        %v709 = vmul.f32 %v642, %v706
        %710 = vset.pattern.permute.xlu0 1
        %711 = vperm.xlu0 %710, %v528
        %v712 = vpop.permute.xlu0 %711
        %v714 = vmul.f32 %v708, %v712
        %v715 = vmul.f32 %v709, %v712
        %716 = vset.pattern.permute.xlu0 2
        %717 = vperm.xlu0 %716, %v528
        %v718 = vpop.permute.xlu0 %717
        %v720 = vadd.f32 %v714, %v718
        %v721 = vadd.f32 %v715, %v718
        %vm722 = vcmp.gt.f32.partialorder %v720, 0.0
        %vm723 = vcmp.gt.f32.partialorder %v721, 0.0
        %v724 = vmul.f32 %v720, 1.442695
        %v725 = vpow.pop %v724
        %v726 = vmul.f32 %v721, 1.442695
        %v727 = vpow.pop %v726
        %v728 = vsub.f32 %v725, 1.0
        %v729 = vsub.f32 %v727, 1.0
        %v730 = vsel %vm722, %v720, %v728
        %v731 = vsel %vm723, %v721, %v729
        %732 = vst [vmem:[%s284] sm:$0xff] %v730
        %733 = vst [vmem:[%s284 + $0x8] sm:$0xff] %v731
        %s734 = sand.u32 %s163, 1
        %s735 = scalar_lea.sflag [#allocation4], %s734
        %s736 = sand.u32 %s163, 1
        %s737 = smul.addr %s736, 16
        %s738 = scalar_lea.vmem [#allocation7], %s737
        // Predicated region
        $region53: #{tpu_custom_call.1} parent=43 // pred_check
          %p739 = pneg %p173
        $region54: #{tpu_custom_call.1} parent=43 // pred_check_branch
          %741 = sbr.rel (%p739) target = $region56
        $region55: #{tpu_custom_call.1} parent=43 // pred_region
          %743 = vsyncadd %s735, 0
          %s744 = smul.addr %s24, 2
          %s745 = smul.addr %s744, 8
          %s746 = scalar_lea.hbm %s6, %s745
          %s748 = sshll.u32 %s738, 4
          %s749 = int_to_ptr.vmem [resolvable:$true] %s748
          %s750 = sshll.u32 %s746, 4
          %s751 = int_to_ptr.hbm [resolvable:$true] %s750
          %753 = dma.vmem_to_hbm [thread:$0]  %s749, 256, %s751, %s735
        $region56: #{tpu_custom_call.1} parent=43 // pred_fallthru
          _
      $region44: #{tpu_custom_call.1} parent=5 // pred_fallthru
        _
      %p754 = scmp.le.s32.totalorder 2, %s19
      // Predicated region
      $region57: #{tpu_custom_call.1} parent=5 // pred_check
        %p755 = pneg %p754
      $region58: #{tpu_custom_call.1} parent=5 // pred_check_branch
        %757 = sbr.rel (%p755) target = $region60
      $region59: #{tpu_custom_call.1} parent=5 // pred_region
        %s758 = ssub.s32 %s19, 2
        // Predicated region
        $region61: #{tpu_custom_call.1} parent=59 // pred_check
          %p759 = pneg %p179
        $region62: #{tpu_custom_call.1} parent=59 // pred_check_branch
          %761 = sbr.rel (%p759) target = $region64
        $region63: #{tpu_custom_call.1} parent=59 // pred_region
          %s762 = sand.u32 %s164, 1
          %s763 = scalar_lea.sflag [#allocation4], %s762
          %s764 = sand.u32 %s164, 1
          %s765 = smul.addr %s764, 16
          %s766 = scalar_lea.vmem [#allocation7], %s765
          %768 = dma.done %s763, 256
        $region64: #{tpu_custom_call.1} parent=59 // pred_fallthru
          _
      $region60: #{tpu_custom_call.1} parent=5 // pred_fallthru
        _
    $region6: #{tpu_custom_call.1} parent=1 // loop_footer
      %s23 = sadd.s32 1, %s19
    $region7: #{tpu_custom_call.1} parent=1 // loop_footer_branch
      %18 = sbr.rel target = $region3
    $region8: #{tpu_custom_call.1} parent=1 // loop_exit
      _
    %769 = vsyncpa [#allocation3], 1
    %s770 = scalar_lea.sflag [#allocation3], 1
    %771 = vsyncpa %s770, 1
    %772 = vsyncpa [#allocation6], 1
    %773 = vsyncpa [#allocation4], 1
    %s774 = scalar_lea.sflag [#allocation4], 1
    %775 = vsyncpa %s774, 1

</llo_original>
